<compile_context>
chip_gen: v6e
topology: v6e:2x2x1
jax: 0.10.0
libtpu: 0.0.40
codegen_flags: <defaults>
</compile_context>

<pallas_src>
import functools

import jax
import jax.numpy as jnp
from jax.experimental import pallas as pl
from jax.experimental.pallas import tpu as pltpu


# ---------------------------------------------------------------------------
# Kernels
# ---------------------------------------------------------------------------

def _ce_kernel(logits_ref, targets_ref, loss_ref, *, epsilon, num_classes,
               native_minmax):
    """Single (TB, C) tile: whole class axis resident in the block."""
    x = logits_ref[...]                                   # (tb, C) native dtype
    tb, c = x.shape
    xf = x.astype(jnp.float32)

    # Row max (exact in bf16; native-packed VALU on v6e/v7x).
    if native_minmax:
        m = jnp.max(x, axis=-1, keepdims=True).astype(jnp.float32)
    else:
        m = jnp.max(xf, axis=-1, keepdims=True)

    lse = jnp.log(jnp.sum(jnp.exp(xf - m), axis=-1, keepdims=True))
    sum_x = jnp.sum(xf, axis=-1, keepdims=True)

    class_ids = jax.lax.broadcasted_iota(jnp.int32, (tb, c), 1)
    hit = class_ids == targets_ref[...]
    if native_minmax:
        sel = jnp.where(hit, x, jnp.array(0, x.dtype)).astype(jnp.float32)
    else:
        sel = jnp.where(hit, xf, 0.0)
    x_t = jnp.sum(sel, axis=-1, keepdims=True)

    # loss = (1-eps)*(m+lse - x_t) + (eps/C)*(C*(m+lse) - sum_x)
    #      = (m + lse) - (1-eps)*x_t - (eps/C)*sum_x
    loss_ref[...] = ((m + lse)
                     - (1.0 - epsilon) * x_t
                     - (epsilon / num_classes) * sum_x)


def _ce_chunked_kernel(logits_ref, targets_ref, loss_ref,
                       m_sc, l_sc, sx_sc, xt_sc,
                       *, epsilon, num_classes, native_minmax):
    """(TB, TC) tile with online log-sum-exp over the class grid axis."""
    k = pl.program_id(1)

    @pl.when(k == 0)
    def _():
        m_sc[...] = jnp.full_like(m_sc, -jnp.inf)
        l_sc[...] = jnp.zeros_like(l_sc)
        sx_sc[...] = jnp.zeros_like(sx_sc)
        xt_sc[...] = jnp.zeros_like(xt_sc)

    x = logits_ref[...]                                   # (tb, tc) native dtype
    tb, tc = x.shape
    xf = x.astype(jnp.float32)

    col_ids = k * tc + jax.lax.broadcasted_iota(jnp.int32, (tb, tc), 1)
    valid = col_ids < num_classes                         # mask padded lanes

    if native_minmax:
        m_blk = jnp.max(jnp.where(valid, x, jnp.array(-jnp.inf, x.dtype)),
                        axis=-1, keepdims=True).astype(jnp.float32)
    else:
        m_blk = jnp.max(jnp.where(valid, xf, -jnp.inf), axis=-1, keepdims=True)

    m_prev = m_sc[...]
    m_new = jnp.maximum(m_prev, m_blk)
    alpha = jnp.exp(m_prev - m_new)                       # 0 on first chunk

    p = jnp.where(valid, jnp.exp(xf - m_new), 0.0)
    l_sc[...] = alpha * l_sc[...] + jnp.sum(p, axis=-1, keepdims=True)
    sx_sc[...] += jnp.sum(jnp.where(valid, xf, 0.0), axis=-1, keepdims=True)

    hit = col_ids == targets_ref[...]
    if native_minmax:
        sel = jnp.where(hit, x, jnp.array(0, x.dtype)).astype(jnp.float32)
    else:
        sel = jnp.where(hit, xf, 0.0)
    xt_sc[...] += jnp.sum(sel, axis=-1, keepdims=True)
    m_sc[...] = m_new

    @pl.when(k == pl.num_programs(1) - 1)
    def _():
        lse = m_sc[...] + jnp.log(l_sc[...])
        loss_ref[...] = (lse
                         - (1.0 - epsilon) * xt_sc[...]
                         - (epsilon / num_classes) * sx_sc[...])


# ---------------------------------------------------------------------------
# Tile-size policy
# ---------------------------------------------------------------------------

_LANE = 128
_MAX_ROWS = 8192   # blocks are already multi-MiB well before this cap


def _tpu_caps():
    """Returns (per-core VMEM capacity bytes, native bf16 VALU available)."""
    vmem_cap = 64 * 1024 * 1024            # conservative fallback: v7x per-TC
    try:
        vmem_cap = int(pltpu.get_tpu_info().vmem_capacity_bytes)
    except Exception:
        pass
    native_bf16 = False
    try:
        kind = jax.devices()[0].device_kind.lower()
        native_bf16 = ("v6" in kind) or ("v7" in kind)
    except Exception:
        pass
    return vmem_cap, native_bf16


def _row_bytes(cols, itemsize, n_buf=2):
    # n_buf-deep pipelined native-dtype stream + ~4 full-width f32/i32
    # in-kernel temporaries (upcast, shifted, exp, iota/select).
    return n_buf * cols * itemsize + 16 * cols


def _round_rows(tb, b, sublane):
    tb = max(sublane, (int(tb) // sublane) * sublane)
    return b if tb >= b else tb


# ---------------------------------------------------------------------------
# Wrapper
# ---------------------------------------------------------------------------

def cross_entropy_on(inputs, targets, *, num_classes, epsilon=0.1,
                     reduction=False, block_b=None, block_c=None):
    """Pallas implementation of CrossEntropyOn.forward.

    Args:
      inputs:  (B, num_classes) logits (f32 or bf16; streamed in native dtype).
      targets: (B,) integer class labels.
      block_b: optional batch-tile override (rounded to the sublane multiple).
      block_c: optional class-chunk override; forces the chunked-C online-LSE
               path when smaller than num_classes.
    Returns:
      (B,) per-sample loss (float32), or scalar mean if reduction=True.
    """
    b, c = inputs.shape
    assert c == num_classes
    epsilon = float(epsilon)
    targets_col = targets.astype(jnp.int32).reshape(b, 1)

    itemsize = jnp.dtype(inputs.dtype).itemsize
    sublane = 16 if itemsize < 4 else 8

    vmem_cap, native_bf16 = _tpu_caps()
    # Scoped-VMEM limit: ~3/4 of physical, capped with headroom.
    #   v5e/v6e (128 MiB) -> 96 MiB, v7x (64 MiB) -> 48 MiB.
    vmem_limit = int(min(vmem_cap * 3 // 4, 112 * 1024 * 1024))
    budget = (vmem_limit * 7) // 10        # tile budget; rest is slack

    native_minmax = bool(native_bf16 and inputs.dtype == jnp.bfloat16)

    cost = pl.CostEstimate(
        flops=6 * b * c,
        transcendentals=b * c,
        bytes_accessed=b * c * itemsize + 2 * b * 4,
    )

    use_chunked = ((block_c is not None and block_c < c)
                   or budget // _row_bytes(c, itemsize) < sublane)

    if not use_chunked:
        tb = _round_rows(
            block_b if block_b is not None
            else min(budget // _row_bytes(c, itemsize), _MAX_ROWS),
            b, sublane)
        kernel = functools.partial(
            _ce_kernel, epsilon=epsilon, num_classes=c,
            native_minmax=native_minmax)
        loss = pl.pallas_call(
            kernel,
            out_shape=jax.ShapeDtypeStruct((b, 1), jnp.float32),
            grid=(pl.cdiv(b, tb),),
            in_specs=[
                pl.BlockSpec((tb, c), lambda i: (i, 0)),
                pl.BlockSpec((tb, 1), lambda i: (i, 0)),
            ],
            out_specs=pl.BlockSpec((tb, 1), lambda i: (i, 0)),
            compiler_params=pltpu.CompilerParams(
                dimension_semantics=("parallel",),
                vmem_limit_bytes=vmem_limit),
            cost_estimate=cost,
        )(inputs, targets_col)
    else:
        # Chunked class axis: online log-sum-exp + running sum_x / x_t.
        tc = block_c if block_c is not None else 2048
        tc = min(int(tc), c)
        if tc < c:
            tc = max(_LANE, (tc // _LANE) * _LANE)   # lane multiple unless full C
        tb = _round_rows(
            block_b if block_b is not None
            else min(budget // _row_bytes(tc, itemsize), _MAX_ROWS),
            b, sublane)
        kernel = functools.partial(
            _ce_chunked_kernel, epsilon=epsilon, num_classes=c,
            native_minmax=native_minmax)
        loss = pl.pallas_call(
            kernel,
            out_shape=jax.ShapeDtypeStruct((b, 1), jnp.float32),
            grid=(pl.cdiv(b, tb), pl.cdiv(c, tc)),
            in_specs=[
                pl.BlockSpec((tb, tc), lambda i, k: (i, k)),
                pl.BlockSpec((tb, 1), lambda i, k: (i, 0)),
            ],
            out_specs=pl.BlockSpec((tb, 1), lambda i, k: (i, 0)),
            scratch_shapes=[pltpu.VMEM((tb, 1), jnp.float32)] * 4,
            compiler_params=pltpu.CompilerParams(
                dimension_semantics=("parallel", "arbitrary"),
                vmem_limit_bytes=vmem_limit),
            cost_estimate=cost,
        )(inputs, targets_col)

    loss = loss.reshape(b)
    if reduction:
        return jnp.mean(loss)
    return loss


# ---------------------------------------------------------------------------
# Reference & tests
# ---------------------------------------------------------------------------

def _reference(inputs, targets, num_classes, epsilon=0.1):
    log_probs = jax.nn.log_softmax(inputs.astype(jnp.float32), axis=1)
    one_hot = jax.nn.one_hot(targets, num_classes, dtype=jnp.float32)
    smoothed = (1.0 - epsilon) * one_hot + epsilon / num_classes
    return jnp.sum(-smoothed * log_probs, axis=1)


if __name__ == "__main__":
    key = jax.random.PRNGKey(0)
    k1, k2, k3, k4, k5, k6 = jax.random.split(key, 6)

    # Case 1: small f32 problem, single full-extent block.
    batch, ncls = 8, 32
    logits = jax.random.normal(k1, (batch, ncls), dtype=jnp.float32)
    labels = jax.random.randint(k2, (batch,), 0, ncls, dtype=jnp.int32)
    loss = jax.block_until_ready(
        cross_entropy_on(logits, labels, num_classes=ncls, epsilon=0.1))
    ref = _reference(logits, labels, ncls, 0.1)
    assert loss.shape == (batch,)
    assert jnp.allclose(loss, ref, atol=1e-5, rtol=1e-5), (loss, ref)

    # Case 2: bf16 logits, batch-tiled grid with partial last tile (pipelined
    # path; bf16 max/select runs natively on v6e/v7x).
    batch2, ncls2 = 48, 128
    logits2 = jax.random.normal(k3, (batch2, ncls2),
                                dtype=jnp.float32).astype(jnp.bfloat16)
    labels2 = jax.random.randint(k4, (batch2,), 0, ncls2, dtype=jnp.int32)
    loss2 = jax.block_until_ready(
        cross_entropy_on(logits2, labels2, num_classes=ncls2, epsilon=0.1,
                         block_b=16))
    ref2 = _reference(logits2, labels2, ncls2, 0.1)
    assert loss2.shape == (batch2,)
    assert jnp.allclose(loss2, ref2, atol=2e-3, rtol=2e-3), (loss2, ref2)

    # Case 3: chunked-C online-LSE path (forced via block_c): masked padded
    # lanes in the last class chunk and a partial last batch tile.
    batch3, ncls3 = 24, 160
    logits3 = jax.random.normal(k5, (batch3, ncls3),
                                dtype=jnp.float32).astype(jnp.bfloat16)
    labels3 = jax.random.randint(k6, (batch3,), 0, ncls3, dtype=jnp.int32)
    loss3 = jax.block_until_ready(
        cross_entropy_on(logits3, labels3, num_classes=ncls3, epsilon=0.1,
                         block_b=16, block_c=128))
    ref3 = _reference(logits3, labels3, ncls3, 0.1)
    assert loss3.shape == (batch3,)
    assert jnp.allclose(loss3, ref3, atol=2e-3, rtol=2e-3), (loss3, ref3)

    # Case 4: reduction=True (mean).
    loss_mean = jax.block_until_ready(
        cross_entropy_on(logits, labels, num_classes=ncls, epsilon=0.1,
                         reduction=True))
    assert jnp.allclose(loss_mean, jnp.mean(ref), atol=1e-5, rtol=1e-5)

    print("KERNEL_OK")
</pallas_src>

<mosaic_0001>
module attributes {stable_mosaic.version = 11 : i64} {
  func.func @_ce_kernel(%arg0: i32, %arg1: memref<8x32xf32, #tpu.memory_space<vmem>>, %arg2: memref<8x1xi32, #tpu.memory_space<vmem>>, %arg3: memref<8x1xf32, #tpu.memory_space<vmem>>) attributes {dimension_semantics = [#tpu.dimension_semantics<parallel>], iteration_bounds = array<i64: 1>, scalar_prefetch = 0 : i64, scratch_operands = 0 : i64, tpu.core_type = #tpu.core_type<tc>, window_params = [{transform_indices = @transform_0, window_bounds = array<i64: 8, 32>}, {transform_indices = @transform_1, window_bounds = array<i64: 8, 1>}, {transform_indices = @transform_2, window_bounds = array<i64: 8, 1>}]} {
    %c0 = arith.constant 0 : index
    %c0_0 = arith.constant 0 : index
    %0 = vector.load %arg1[%c0, %c0_0] : memref<8x32xf32, #tpu.memory_space<vmem>>, vector<8x32xf32>
    %cst = arith.constant dense<0xFF800000> : vector<8xf32>
    %1 = vector.multi_reduction <maximumf>, %0, %cst [1] : vector<8x32xf32> to vector<8xf32>
    %2 = vector.shape_cast %1 : vector<8xf32> to vector<8x1xf32>
    %3 = vector.broadcast %2 : vector<8x1xf32> to vector<8x32xf32>
    %4 = arith.subf %0, %3 : vector<8x32xf32>
    %5 = math.exp %4 : vector<8x32xf32>
    %cst_1 = arith.constant dense<0.000000e+00> : vector<8xf32>
    %6 = vector.multi_reduction <add>, %5, %cst_1 [1] : vector<8x32xf32> to vector<8xf32>
    %7 = vector.shape_cast %6 : vector<8xf32> to vector<8x1xf32>
    %8 = math.log %7 : vector<8x1xf32>
    %cst_2 = arith.constant dense<0.000000e+00> : vector<8xf32>
    %9 = vector.multi_reduction <add>, %0, %cst_2 [1] : vector<8x32xf32> to vector<8xf32>
    %10 = vector.shape_cast %9 : vector<8xf32> to vector<8x1xf32>
    %11 = tpu.iota {dimensions = array<i32: 1>} : vector<8x32xi32>
    %c0_3 = arith.constant 0 : index
    %c0_4 = arith.constant 0 : index
    %12 = vector.load %arg2[%c0_3, %c0_4] : memref<8x1xi32, #tpu.memory_space<vmem>>, vector<8x1xi32>
    %13 = vector.broadcast %12 : vector<8x1xi32> to vector<8x32xi32>
    %14 = arith.cmpi eq, %11, %13 : vector<8x32xi32>
    %cst_5 = arith.constant 0.000000e+00 : f32
    %15 = vector.broadcast %cst_5 : f32 to vector<8x32xf32>
    %16 = arith.select %14, %0, %15 : vector<8x32xi1>, vector<8x32xf32>
    %cst_6 = arith.constant dense<0.000000e+00> : vector<8xf32>
    %17 = vector.multi_reduction <add>, %16, %cst_6 [1] : vector<8x32xf32> to vector<8xf32>
    %18 = vector.shape_cast %17 : vector<8xf32> to vector<8x1xf32>
    %19 = arith.addf %2, %8 : vector<8x1xf32>
    %cst_7 = arith.constant 0.899999976 : f32
    %20 = vector.broadcast %cst_7 : f32 to vector<8x1xf32>
    %21 = arith.mulf %20, %18 : vector<8x1xf32>
    %22 = arith.subf %19, %21 : vector<8x1xf32>
    %cst_8 = arith.constant 3.125000e-03 : f32
    %23 = vector.broadcast %cst_8 : f32 to vector<8x1xf32>
    %24 = arith.mulf %23, %10 : vector<8x1xf32>
    %25 = arith.subf %22, %24 : vector<8x1xf32>
    %c0_9 = arith.constant 0 : index
    %c0_10 = arith.constant 0 : index
    %26 = vector.load %arg3[%c0_9, %c0_10] : memref<8x1xf32, #tpu.memory_space<vmem>>, vector<8x1xf32>
    tpu.vector_store %arg3[%c0_9, %c0_10], %25 {strides = array<i32>} : memref<8x1xf32, #tpu.memory_space<vmem>>, vector<8x1xf32>,
    return
  }
  func.func @transform_0(%arg0: i32) -> (i32, i32) {
    %c0_i32 = arith.constant 0 : i32
    %c0_i32_0 = arith.constant 0 : i32
    return %arg0, %c0_i32 : i32, i32
  }
  func.func @transform_1(%arg0: i32) -> (i32, i32) {
    %c0_i32 = arith.constant 0 : i32
    %c0_i32_0 = arith.constant 0 : i32
    return %arg0, %c0_i32 : i32, i32
  }
  func.func @transform_2(%arg0: i32) -> (i32, i32) {
    %c0_i32 = arith.constant 0 : i32
    %c0_i32_0 = arith.constant 0 : i32
    return %arg0, %c0_i32 : i32, i32
  }
}

</mosaic_0001>

<llo_original>
// kernel: tpu_custom_call.1
$region0: #{tpu_custom_call.1}
  #allocation0 [shape = 'u32[]', space=smem, size = 0x4, offset = 0x4, fixed_abs, tag = 'smem constant byte address 0x4 - core index']
  #allocation1 [shape = 'u32[144,128]{1,0:T(1,128)}', space=vmem, size = 0x12000, scoped, tag = 'internal scratch']
  %s0 = inlined_call_operand.vmem [shape: f32[8,32], index: 0, kind: input, shape index: {}]
  %s1 = inlined_call_operand.vmem [shape: s32[8,1], index: 1, kind: input, shape index: {}]
  %s2 = inlined_call_operand.vmem [shape: f32[8,1], index: 2, kind: output, shape index: {}]
  %s3 = sld [smem:[#allocation0]]
  $region18: #{tpu_custom_call.1} parent=0
    _
  %s5 = ssub.s32 1, %s3
  %s6 = scalar_select 0, %s5, %s3
  // Predicated region
  $region2: #{tpu_custom_call.1} parent=0 // pred_check
    _
  $region3: #{tpu_custom_call.1} parent=0 // pred_check_branch
    %8 = sbr.rel (0) target = $region5
  $region4: #{tpu_custom_call.1} parent=0 // pred_region
    _
  $region5: #{tpu_custom_call.1} parent=0 // pred_fallthru
    _
  // Predicated region
  $region6: #{tpu_custom_call.1} parent=0 // pred_check
    _
  $region7: #{tpu_custom_call.1} parent=0 // pred_check_branch
    %10 = sbr.rel (0) target = $region9
  $region8: #{tpu_custom_call.1} parent=0 // pred_region
    _
  $region9: #{tpu_custom_call.1} parent=0 // pred_fallthru
    _
  %v11 = vld [vmem:[%s0] sm:$0xff]
  %vm12 = vcmask 261120
  %v13 = vsel %vm12, %v11, -inf
  %14 = vmax.xlane.f32.xlu0 %v13
  %v15 = vpop.xlane.xlu0 %14
  %v16 = vsub.f32 %v11, %v15
  %v17 = vmul.f32 %v16, 1.442695
  %v18 = vpow.pop %v17
  %v19 = vsel %vm12, %v18, 0.0
  %20 = vadd.xlane.f32.xlu0 %v19
  %v21 = vpop.xlane.xlu0 %20
  %v22 = vlog2.pop %v21
  %v23 = vmul.f32 %v22, 0.6931472
  %v24 = vsel %vm12, %v11, 0.0
  %25 = vadd.xlane.f32.xlu0 %v24
  %v26 = vpop.xlane.xlu0 %25
  %v27 = vlaneseq
  %v28 = vand.u32 %v27, 127
  %v29 = vld [vmem:[%s1] sm:$0xff]
  %30 = vset.pattern.permute.xlu0 0
  %31 = vperm.xlu0 %30, %v29
  %v32 = vpop.permute.xlu0 %31
  %vm33 = vcmp.eq.s32.totalorder %v28, %v32
  %v34 = vsel %vm33, %v11, 0.0
  %v35 = vsel %vm12, %v34, 0.0
  %36 = vadd.xlane.f32.xlu0 %v35
  %v37 = vpop.xlane.xlu0 %36
  %v38 = vadd.f32 %v15, %v23
  %v39 = vmul.f32 %v37, 0.9
  %v40 = vsub.f32 %v38, %v39
  %v41 = vmul.f32 %v26, 0.003125
  %v42 = vsub.f32 %v40, %v41
  %vm43 = vcmask 7168
  %44 = vst.msk [vmem:[%s2] sm:$0xff] %vm43, %v42
  // Predicated region
  $region10: #{tpu_custom_call.1} parent=0 // pred_check
    _
  $region11: #{tpu_custom_call.1} parent=0 // pred_check_branch
    %46 = sbr.rel (0) target = $region13
  $region12: #{tpu_custom_call.1} parent=0 // pred_region
    _
  $region13: #{tpu_custom_call.1} parent=0 // pred_fallthru
    _
  // Predicated region
  $region14: #{tpu_custom_call.1} parent=0 // pred_check
    _
  $region15: #{tpu_custom_call.1} parent=0 // pred_check_branch
    %48 = sbr.rel (0) target = $region17
  $region16: #{tpu_custom_call.1} parent=0 // pred_region
    _
  $region17: #{tpu_custom_call.1} parent=0 // pred_fallthru
    _

</llo_original>
